<compile_context>
chip_gen: v6e
topology: v6e:2x2x1
jax: 0.10.0
libtpu: 0.0.40
codegen_flags: <defaults>
</compile_context>

<pallas_src>
import jax
import jax.numpy as jnp
from jax.experimental import pallas as pl
from jax.experimental.pallas import tpu as pltpu


def _se_kernel(x_ref, w1_ref, b1_ref, w2_ref, b2_ref, o_ref):
    # x_ref: (B_tile, C_exp, HW) block -- channels on sublanes, spatial on lanes.
    x = x_ref[...]                                                   # (B, C, HW)
    hw = x.shape[-1]

    # Global average pool over spatial positions; accumulate in f32 without
    # materializing a full f32 copy of the tile.
    pooled = jnp.sum(x, axis=-1, dtype=jnp.float32) * (1.0 / hw)     # (B, C_exp)

    # fc1 (1x1 conv == matmul) + SiLU
    h = jnp.dot(pooled, w1_ref[...],
                preferred_element_type=jnp.float32) + b1_ref[...]    # (B, C_sq)
    h = h * jax.nn.sigmoid(h)

    # fc2 (1x1 conv == matmul) + Sigmoid
    s = jnp.dot(h, w2_ref[...],
                preferred_element_type=jnp.float32) + b2_ref[...]    # (B, C_exp)
    s = jax.nn.sigmoid(s)

    # Scale every spatial position of every channel (broadcast over lanes),
    # multiplying in the input dtype.
    o_ref[...] = (x * s.astype(x.dtype)[:, :, None]).astype(o_ref.dtype)


def squeeze_excitation(x_nchw, w1, b1, w2, b2, *, vmem_budget_bytes=8 * 1024 * 1024):
    """x_nchw: (N, C_exp, H, W).  w1: (C_exp, C_sq), b1: (1, C_sq),
    w2: (C_sq, C_exp), b2: (1, C_exp)."""
    N, C, H, W = x_nchw.shape
    HW = H * W
    C_sq = w1.shape[1]

    # Free layout change: NCHW -> (N, C, HW). No transpose / extra HBM traffic.
    x_ncl = x_nchw.reshape(N, C, HW)

    # Pick the largest batch tile (dividing N) whose double-buffered in+out
    # blocks fit the VMEM budget. For small problems the whole batch is one
    # grid step (amortizes the ~0.35us/step pipeline overhead).
    bytes_per_batch = C * HW * x_nchw.dtype.itemsize
    max_tile = max(1, vmem_budget_bytes // max(1, 4 * bytes_per_batch))
    b_tile = 1
    for d in range(1, N + 1):
        if N % d == 0 and d <= max_tile:
            b_tile = d
    grid = (N // b_tile,)

    out_ncl = pl.pallas_call(
        _se_kernel,
        out_shape=jax.ShapeDtypeStruct((N, C, HW), x_nchw.dtype),
        grid_spec=pltpu.PrefetchScalarGridSpec(
            num_scalar_prefetch=0,
            grid=grid,
            in_specs=[
                pl.BlockSpec((b_tile, C, HW), lambda n: (n, 0, 0)),  # x tile
                pl.BlockSpec((C, C_sq), lambda n: (0, 0)),           # w1 (resident)
                pl.BlockSpec((1, C_sq), lambda n: (0, 0)),           # b1
                pl.BlockSpec((C_sq, C), lambda n: (0, 0)),           # w2
                pl.BlockSpec((1, C), lambda n: (0, 0)),              # b2
            ],
            out_specs=pl.BlockSpec((b_tile, C, HW), lambda n: (n, 0, 0)),
        ),
        compiler_params=pltpu.CompilerParams(
            dimension_semantics=("parallel",)),
    )(x_ncl, w1, b1, w2, b2)

    # Free reshape back to NCHW.
    return out_ncl.reshape(N, C, H, W)


def _reference(x_nchw, w1, b1, w2, b2):
    pooled = jnp.mean(x_nchw, axis=(2, 3))                           # (N, C_exp)
    h = pooled @ w1 + b1
    h = h * jax.nn.sigmoid(h)
    s = jax.nn.sigmoid(h @ w2 + b2)                                  # (N, C_exp)
    return x_nchw * s[:, :, None, None]


if __name__ == "__main__":
    # Module config: in_channel=16, expand_channel=32, squeeze_factor=4
    #   -> squeeze_channel = in_channel // 4 = 4
    in_channel, expand_channel, squeeze_factor = 16, 32, 4
    squeeze_channel = in_channel // squeeze_factor

    N, H, W = 2, 16, 16

    key = jax.random.PRNGKey(0)
    kx, k1, k2, k3, k4 = jax.random.split(key, 5)

    x = jax.random.normal(kx, (N, expand_channel, H, W), dtype=jnp.float32)

    # Deterministic parameter init (1x1 conv weights folded into matmul form).
    # PyTorch fc1.weight has shape (squeeze, expand, 1, 1); we store its transpose
    # so the kernel can do pooled(B,C_exp) @ w1(C_exp,C_sq).
    w1 = 0.1 * jax.random.normal(k1, (expand_channel, squeeze_channel), jnp.float32)
    b1 = 0.1 * jax.random.normal(k2, (1, squeeze_channel), jnp.float32)
    w2 = 0.1 * jax.random.normal(k3, (squeeze_channel, expand_channel), jnp.float32)
    b2 = 0.1 * jax.random.normal(k4, (1, expand_channel), jnp.float32)

    out = squeeze_excitation(x, w1, b1, w2, b2)
    out = jax.block_until_ready(out)

    ref = _reference(x, w1, b1, w2, b2)
    assert out.shape == x.shape
    assert jnp.allclose(out, ref, atol=1e-5, rtol=1e-5)

    print("KERNEL_OK")
</pallas_src>

<mosaic_0001>
module attributes {stable_mosaic.version = 11 : i64} {
  func.func @_se_kernel(%arg0: i32, %arg1: memref<2x32x256xf32, #tpu.memory_space<vmem>>, %arg2: memref<32x4xf32, #tpu.memory_space<vmem>>, %arg3: memref<1x4xf32, #tpu.memory_space<vmem>>, %arg4: memref<4x32xf32, #tpu.memory_space<vmem>>, %arg5: memref<1x32xf32, #tpu.memory_space<vmem>>, %arg6: memref<2x32x256xf32, #tpu.memory_space<vmem>>) attributes {dimension_semantics = [#tpu.dimension_semantics<parallel>], iteration_bounds = array<i64: 1>, scalar_prefetch = 0 : i64, scratch_operands = 0 : i64, tpu.core_type = #tpu.core_type<tc>, window_params = [{transform_indices = @transform_0, window_bounds = array<i64: 2, 32, 256>}, {pipeline_mode = #tpu.pipeline_mode<synchronous>, transform_indices = @transform_1, window_bounds = array<i64: 32, 4>}, {pipeline_mode = #tpu.pipeline_mode<synchronous>, transform_indices = @transform_2, window_bounds = array<i64: 1, 4>}, {pipeline_mode = #tpu.pipeline_mode<synchronous>, transform_indices = @transform_3, window_bounds = array<i64: 4, 32>}, {pipeline_mode = #tpu.pipeline_mode<synchronous>, transform_indices = @transform_4, window_bounds = array<i64: 1, 32>}, {transform_indices = @transform_5, window_bounds = array<i64: 2, 32, 256>}]} {
    %c0 = arith.constant 0 : index
    %c0_0 = arith.constant 0 : index
    %c0_1 = arith.constant 0 : index
    %0 = vector.load %arg1[%c0, %c0_0, %c0_1] : memref<2x32x256xf32, #tpu.memory_space<vmem>>, vector<2x32x256xf32>
    %cst = arith.constant dense<0.000000e+00> : vector<2x32xf32>
    %1 = vector.multi_reduction <add>, %0, %cst [2] : vector<2x32x256xf32> to vector<2x32xf32>
    %cst_2 = arith.constant 3.906250e-03 : f32
    %2 = vector.broadcast %cst_2 : f32 to vector<2x32xf32>
    %3 = arith.mulf %1, %2 : vector<2x32xf32>
    %c0_3 = arith.constant 0 : index
    %c0_4 = arith.constant 0 : index
    %4 = vector.load %arg2[%c0_3, %c0_4] : memref<32x4xf32, #tpu.memory_space<vmem>>, vector<32x4xf32>
    %cst_5 = arith.constant dense<0.000000e+00> : vector<2x4xf32>
    %5 = tpu.matmul %3, %4, %cst_5 {dimension_numbers = #tpu.dot_dimension_numbers<[1], [0], [0], [1], [0, 0, 1, 1], [], []>} : vector<2x32xf32>, vector<32x4xf32>, vector<2x4xf32> -> vector<2x4xf32>
    %c0_6 = arith.constant 0 : index
    %c0_7 = arith.constant 0 : index
    %6 = vector.load %arg3[%c0_6, %c0_7] : memref<1x4xf32, #tpu.memory_space<vmem>>, vector<1x4xf32>
    %7 = vector.broadcast %6 : vector<1x4xf32> to vector<2x4xf32>
    %8 = arith.addf %5, %7 : vector<2x4xf32>
    %9 = arith.negf %8 : vector<2x4xf32>
    %10 = math.exp %9 : vector<2x4xf32>
    %cst_8 = arith.constant 1.000000e+00 : f32
    %11 = vector.broadcast %cst_8 : f32 to vector<2x4xf32>
    %12 = arith.addf %11, %10 : vector<2x4xf32>
    %13 = arith.divf %11, %12 : vector<2x4xf32>
    %14 = arith.mulf %8, %13 : vector<2x4xf32>
    %c0_9 = arith.constant 0 : index
    %c0_10 = arith.constant 0 : index
    %15 = vector.load %arg4[%c0_9, %c0_10] : memref<4x32xf32, #tpu.memory_space<vmem>>, vector<4x32xf32>
    %cst_11 = arith.constant dense<0.000000e+00> : vector<2x32xf32>
    %16 = tpu.matmul %14, %15, %cst_11 {dimension_numbers = #tpu.dot_dimension_numbers<[1], [0], [0], [1], [0, 0, 1, 1], [], []>} : vector<2x4xf32>, vector<4x32xf32>, vector<2x32xf32> -> vector<2x32xf32>
    %c0_12 = arith.constant 0 : index
    %c0_13 = arith.constant 0 : index
    %17 = vector.load %arg5[%c0_12, %c0_13] : memref<1x32xf32, #tpu.memory_space<vmem>>, vector<1x32xf32>
    %18 = vector.broadcast %17 : vector<1x32xf32> to vector<2x32xf32>
    %19 = arith.addf %16, %18 : vector<2x32xf32>
    %20 = arith.negf %19 : vector<2x32xf32>
    %21 = math.exp %20 : vector<2x32xf32>
    %cst_14 = arith.constant 1.000000e+00 : f32
    %22 = vector.broadcast %cst_14 : f32 to vector<2x32xf32>
    %23 = arith.addf %22, %21 : vector<2x32xf32>
    %24 = arith.divf %22, %23 : vector<2x32xf32>
    %25 = vector.shape_cast %24 : vector<2x32xf32> to vector<2x32x1xf32>
    %26 = vector.broadcast %25 : vector<2x32x1xf32> to vector<2x32x256xf32>
    %27 = arith.mulf %0, %26 : vector<2x32x256xf32>
    %c0_15 = arith.constant 0 : index
    %c0_16 = arith.constant 0 : index
    %c0_17 = arith.constant 0 : index
    %28 = vector.load %arg6[%c0_15, %c0_16, %c0_17] : memref<2x32x256xf32, #tpu.memory_space<vmem>>, vector<2x32x256xf32>
    tpu.vector_store %arg6[%c0_15, %c0_16, %c0_17], %27 {strides = array<i32>} : memref<2x32x256xf32, #tpu.memory_space<vmem>>, vector<2x32x256xf32>,
    return
  }
  func.func @transform_0(%arg0: i32) -> (i32, i32, i32) {
    %c0_i32 = arith.constant 0 : i32
    %c0_i32_0 = arith.constant 0 : i32
    %c0_i32_1 = arith.constant 0 : i32
    return %arg0, %c0_i32, %c0_i32_0 : i32, i32, i32
  }
  func.func @transform_1(%arg0: i32) -> (i32, i32) {
    %c0_i32 = arith.constant 0 : i32
    %c0_i32_0 = arith.constant 0 : i32
    %c0_i32_1 = arith.constant 0 : i32
    return %c0_i32, %c0_i32_0 : i32, i32
  }
  func.func @transform_2(%arg0: i32) -> (i32, i32) {
    %c0_i32 = arith.constant 0 : i32
    %c0_i32_0 = arith.constant 0 : i32
    %c0_i32_1 = arith.constant 0 : i32
    return %c0_i32, %c0_i32_0 : i32, i32
  }
  func.func @transform_3(%arg0: i32) -> (i32, i32) {
    %c0_i32 = arith.constant 0 : i32
    %c0_i32_0 = arith.constant 0 : i32
    %c0_i32_1 = arith.constant 0 : i32
    return %c0_i32, %c0_i32_0 : i32, i32
  }
  func.func @transform_4(%arg0: i32) -> (i32, i32) {
    %c0_i32 = arith.constant 0 : i32
    %c0_i32_0 = arith.constant 0 : i32
    %c0_i32_1 = arith.constant 0 : i32
    return %c0_i32, %c0_i32_0 : i32, i32
  }
  func.func @transform_5(%arg0: i32) -> (i32, i32, i32) {
    %c0_i32 = arith.constant 0 : i32
    %c0_i32_0 = arith.constant 0 : i32
    %c0_i32_1 = arith.constant 0 : i32
    return %arg0, %c0_i32, %c0_i32_0 : i32, i32, i32
  }
}

</mosaic_0001>

<llo_original>
// kernel: tpu_custom_call.1
$region0: #{tpu_custom_call.1}
  #allocation0 [shape = 'u32[]', space=smem, size = 0x4, offset = 0x4, fixed_abs, tag = 'smem constant byte address 0x4 - core index']
  #allocation1 [shape = 'u32[144,128]{1,0:T(1,128)}', space=vmem, size = 0x12000, scoped, tag = 'internal scratch']
  %s0 = inlined_call_operand.hbm [shape: f32[2,32,256], index: 0, kind: input, shape index: {}]
  %s1 = inlined_call_operand.vmem [shape: f32[32,4], index: 1, kind: input, shape index: {}]
  %s2 = inlined_call_operand.vmem [shape: f32[1,4], index: 2, kind: input, shape index: {}]
  %s3 = inlined_call_operand.vmem [shape: f32[4,32], index: 3, kind: input, shape index: {}]
  %s4 = inlined_call_operand.vmem [shape: f32[1,32], index: 4, kind: input, shape index: {}]
  %s5 = inlined_call_operand.hbm [shape: f32[2,32,256], index: 5, kind: output, shape index: {}]
  %s6 = sld [smem:[#allocation0]]
  $region34: #{tpu_custom_call.1} parent=0
    _
  %s8 = ssub.s32 1, %s6
  %s9 = scalar_select 0, %s8, %s6
  $region1: #{tpu_custom_call.1} parent=0
    #allocation2 [shape = 'u8[65536]{0}', space=vmem, size = 0x10000, scoped, tag = 'input window, operand 0, single buffered']
    #allocation3 [shape = 's32[1]{0}', space=sflag, size = 0x4, scoped, tag = 'scoped memory for tpu_custom_call.1']
    #allocation4 [shape = 's32[1]{0}', space=sflag, size = 0x4, scoped, tag = 'scoped memory for tpu_custom_call.1']
    #allocation5 [shape = 'u8[65536]{0}', space=vmem, size = 0x10000, scoped, tag = 'output window, operand 0, single buffered']
    %10 = vsyncpa [#allocation3], 0
    %11 = vsyncpa [#allocation4], 0
    // Predicated region
    $region2: #{tpu_custom_call.1} parent=1 // pred_check
      _
    $region3: #{tpu_custom_call.1} parent=1 // pred_check_branch
      %13 = sbr.rel (0) target = $region5
    $region4: #{tpu_custom_call.1} parent=1 // pred_region
      %s15 = ssub.s32 2048, 2048
      %16 = vsyncadd [#allocation3], %s15
      %s17 = sshll.u32 [#allocation2], 4
      %s18 = int_to_ptr.vmem [resolvable:$true] %s17
      %23 = dma.hbm_to_vmem [thread:$0]  %s0, 2048, %s18, [#allocation3], 256, 256, 16
    $region5: #{tpu_custom_call.1} parent=1 // pred_fallthru
      _
    // Predicated region
    $region6: #{tpu_custom_call.1} parent=1 // pred_check
      _
    $region7: #{tpu_custom_call.1} parent=1 // pred_check_branch
      %25 = sbr.rel (0) target = $region9
    $region8: #{tpu_custom_call.1} parent=1 // pred_region
      _
    $region9: #{tpu_custom_call.1} parent=1 // pred_fallthru
      _
    // Predicated region
    $region10: #{tpu_custom_call.1} parent=1 // pred_check
      _
    $region11: #{tpu_custom_call.1} parent=1 // pred_check_branch
      %27 = sbr.rel (0) target = $region13
    $region12: #{tpu_custom_call.1} parent=1 // pred_region
      _
    $region13: #{tpu_custom_call.1} parent=1 // pred_fallthru
      _
    // Predicated region
    $region14: #{tpu_custom_call.1} parent=1 // pred_check
      _
    $region15: #{tpu_custom_call.1} parent=1 // pred_check_branch
      %29 = sbr.rel (0) target = $region17
    $region16: #{tpu_custom_call.1} parent=1 // pred_region
      _
    $region17: #{tpu_custom_call.1} parent=1 // pred_fallthru
      _
    // Predicated region
    $region18: #{tpu_custom_call.1} parent=1 // pred_check
      _
    $region19: #{tpu_custom_call.1} parent=1 // pred_check_branch
      %31 = sbr.rel (0) target = $region21
    $region20: #{tpu_custom_call.1} parent=1 // pred_region
      _
    $region21: #{tpu_custom_call.1} parent=1 // pred_fallthru
      _
    // Predicated region
    $region22: #{tpu_custom_call.1} parent=1 // pred_check
      _
    $region23: #{tpu_custom_call.1} parent=1 // pred_check_branch
      %33 = sbr.rel (0) target = $region25
    $region24: #{tpu_custom_call.1} parent=1 // pred_region
      %34 = dma.done [#allocation3], 2048
    $region25: #{tpu_custom_call.1} parent=1 // pred_fallthru
      _
    %v35 = vld [vmem:[#allocation2] sm:$0xff]
    %v36 = vld [vmem:[#allocation2 + $0x8] sm:$0xff]
    %v37 = vld [vmem:[#allocation2 + $0x10] sm:$0xff]
    %v38 = vld [vmem:[#allocation2 + $0x18] sm:$0xff]
    %v39 = vld [vmem:[#allocation2 + $0x20] sm:$0xff]
    %v40 = vld [vmem:[#allocation2 + $0x28] sm:$0xff]
    %v41 = vld [vmem:[#allocation2 + $0x30] sm:$0xff]
    %v42 = vld [vmem:[#allocation2 + $0x38] sm:$0xff]
    %v43 = vld [vmem:[#allocation2 + $0x40] sm:$0xff]
    %v44 = vld [vmem:[#allocation2 + $0x48] sm:$0xff]
    %v45 = vld [vmem:[#allocation2 + $0x50] sm:$0xff]
    %v46 = vld [vmem:[#allocation2 + $0x58] sm:$0xff]
    %v47 = vld [vmem:[#allocation2 + $0x60] sm:$0xff]
    %v48 = vld [vmem:[#allocation2 + $0x68] sm:$0xff]
    %v49 = vld [vmem:[#allocation2 + $0x70] sm:$0xff]
    %v50 = vld [vmem:[#allocation2 + $0x78] sm:$0xff]
    %v51 = vadd.f32 %v35, %v36
    %52 = vadd.xlane.f32.xlu0 %v51
    %v53 = vpop.xlane.xlu0 %52
    %v54 = vadd.f32 %v37, %v38
    %55 = vadd.xlane.f32.xlu0 %v54
    %v56 = vpop.xlane.xlu0 %55
    %v57 = vadd.f32 %v39, %v40
    %58 = vadd.xlane.f32.xlu0 %v57
    %v59 = vpop.xlane.xlu0 %58
    %v60 = vadd.f32 %v41, %v42
    %61 = vadd.xlane.f32.xlu0 %v60
    %v62 = vpop.xlane.xlu0 %61
    %v63 = vadd.f32 %v43, %v44
    %64 = vadd.xlane.f32.xlu0 %v63
    %v65 = vpop.xlane.xlu0 %64
    %v66 = vadd.f32 %v45, %v46
    %67 = vadd.xlane.f32.xlu0 %v66
    %v68 = vpop.xlane.xlu0 %67
    %v69 = vadd.f32 %v47, %v48
    %70 = vadd.xlane.f32.xlu0 %v69
    %v71 = vpop.xlane.xlu0 %70
    %v72 = vadd.f32 %v49, %v50
    %73 = vadd.xlane.f32.xlu0 %v72
    %v74 = vpop.xlane.xlu0 %73
    %v75 = vmul.f32 %v53, 0.00390625
    %v76 = vmul.f32 %v56, 0.00390625
    %v77 = vmul.f32 %v59, 0.00390625
    %v78 = vmul.f32 %v62, 0.00390625
    %v79 = vmul.f32 %v65, 0.00390625
    %v80 = vmul.f32 %v68, 0.00390625
    %v81 = vmul.f32 %v71, 0.00390625
    %v82 = vmul.f32 %v74, 0.00390625
    %v83 = vld [vmem:[%s1] sm:$0xff]
    %v84 = vld [vmem:[%s1 + $0x8] sm:$0xff]
    %v85 = vld [vmem:[%s1 + $0x10] sm:$0xff]
    %v86 = vld [vmem:[%s1 + $0x18] sm:$0xff]
    %v87 = vld [vmem:[%s2] sm:$0x1]
    %v89 = vlaneseq
    %v90 = vshrl.u32 %v89, 7
    %v91 = vsub.s32 0, %v90
    %v92 = vrot.slane %v87, %v91
    %v102 = vlaneseq
    %v103 = vand.u32 %v102, 127
    %v104 = vlaneseq
    %v105 = vshrl.u32 %v104, 7
    %v106 = vsub.s32 %v103, %v105
    %v107 = vrot.slane %v75, %v106
    %v108 = vadd.s32 %v103, 4294967288
    %v109 = vlaneseq
    %v110 = vshrl.u32 %v109, 7
    %v111 = vsub.s32 %v108, %v110
    %v112 = vrot.slane %v76, %v111
    %vm113 = vcmask 130112
    %v114 = vsel %vm113, %v112, %v107
    %v115 = vadd.s32 %v103, 4294967280
    %v116 = vlaneseq
    %v117 = vshrl.u32 %v116, 7
    %v118 = vsub.s32 %v115, %v117
    %v119 = vrot.slane %v77, %v118
    %vm120 = vcmask 195712
    %v121 = vsel %vm120, %v119, %v114
    %v122 = vadd.s32 %v103, 4294967272
    %v123 = vlaneseq
    %v124 = vshrl.u32 %v123, 7
    %v125 = vsub.s32 %v122, %v124
    %v126 = vrot.slane %v78, %v125
    %vm127 = vcmask 261312
    %v128 = vsel %vm127, %v126, %v121
    %v129 = vlaneseq
    %v130 = vshrl.u32 %v129, 7
    %v131 = vsub.s32 %v103, %v130
    %v132 = vrot.slane %v79, %v131
    %v133 = vlaneseq
    %v134 = vshrl.u32 %v133, 7
    %v135 = vsub.s32 %v108, %v134
    %v136 = vrot.slane %v80, %v135
    %v137 = vsel %vm113, %v136, %v132
    %v138 = vlaneseq
    %v139 = vshrl.u32 %v138, 7
    %v140 = vsub.s32 %v115, %v139
    %v141 = vrot.slane %v81, %v140
    %v142 = vsel %vm120, %v141, %v137
    %v143 = vlaneseq
    %v144 = vshrl.u32 %v143, 7
    %v145 = vsub.s32 %v122, %v144
    %v146 = vrot.slane %v82, %v145
    %v147 = vsel %vm127, %v146, %v142
    %vm148 = vcmask 1041409
    %v149 = vsel %vm148, %v147, %v128
    %vm150 = vcmask 261120
    %v151 = vsel %vm150, %v149, 0
    %153 = vmatprep.subr.mxu0 0.0
    %154 = vmatpush1.msra.mxu0 0.0
    %155 = vmatprep.subr.mxu0 0.0
    %156 = vmatpush1.msra.mxu0 0.0
    %157 = vmatprep.subr.mxu0 0.0
    %158 = vmatpush1.msra.mxu0 0.0
    %159 = vmatprep.subr.mxu0 0.0
    %160 = vmatpush1.msra.mxu0 0.0
    %161 = vmatprep.subr.mxu0 0.0
    %162 = vmatpush1.msra.mxu0 0.0
    %163 = vmatprep.subr.mxu0 0.0
    %164 = vmatpush1.msra.mxu0 0.0
    %165 = vmatprep.subr.mxu0 0.0
    %166 = vmatpush1.msra.mxu0 0.0
    %167 = vmatprep.subr.mxu0 0.0
    %168 = vmatpush1.msra.mxu0 0.0
    %169 = vmatprep.subr.mxu0 0.0
    %170 = vmatpush1.msra.mxu0 0.0
    %171 = vmatprep.subr.mxu0 0.0
    %172 = vmatpush1.msra.mxu0 0.0
    %173 = vmatprep.subr.mxu0 0.0
    %174 = vmatpush1.msra.mxu0 0.0
    %175 = vmatprep.subr.mxu0 0.0
    %176 = vmatpush1.msra.mxu0 0.0
    %177 = vmatprep.subr.mxu0 0.0
    %178 = vmatpush1.msra.mxu0 %v86
    %179 = vmatprep.subr.mxu0 0.0
    %180 = vmatpush1.msra.mxu0 %v85
    %181 = vmatprep.subr.mxu0 0.0
    %182 = vmatpush1.msra.mxu0 %v84
    %183 = vmatprep.subr.mxu0 0.0
    %184 = vmatpush1.msra.mxu0 %v83
    %185 = vmatprep.subr.mxu0 0.0
    %186 = vmatpush2.msra.mxu0 0.0
    %187 = vmatprep.subr.mxu0 0.0
    %188 = vmatpush2.msra.mxu0 0.0
    %189 = vmatprep.subr.mxu0 0.0
    %190 = vmatpush2.msra.mxu0 0.0
    %191 = vmatprep.subr.mxu0 0.0
    %192 = vmatpush2.msra.mxu0 0.0
    %193 = vmatprep.subr.mxu0 0.0
    %194 = vmatpush2.msra.mxu0 0.0
    %195 = vmatprep.subr.mxu0 0.0
    %196 = vmatpush2.msra.mxu0 0.0
    %197 = vmatprep.subr.mxu0 0.0
    %198 = vmatpush2.msra.mxu0 0.0
    %199 = vmatprep.subr.mxu0 0.0
    %200 = vmatpush2.msra.mxu0 0.0
    %201 = vmatprep.subr.mxu0 0.0
    %202 = vmatpush2.msra.mxu0 0.0
    %203 = vmatprep.subr.mxu0 0.0
    %204 = vmatpush2.msra.mxu0 0.0
    %205 = vmatprep.subr.mxu0 0.0
    %206 = vmatpush2.msra.mxu0 0.0
    %207 = vmatprep.subr.mxu0 0.0
    %208 = vmatpush2.msra.mxu0 0.0
    %209 = vmatprep.subr.mxu0 0.0
    %210 = vmatpush2.msra.mxu0 0.0
    %211 = vmatprep.subr.mxu0 0.0
    %212 = vmatpush2.msra.mxu0 0.0
    %213 = vmatprep.subr.mxu0 0.0
    %214 = vmatpush2.msra.mxu0 0.0
    %215 = vmatprep.subr.mxu0 0.0
    %216 = vmatpush2.msra.mxu0 0.0
    %217 = vmatprep.mubr.f32.mxu0 0.0
    %218 = vmatmul.mubr.f32.gmra.mxu0 %v151
    %v219 = vpop.f32.mrf.mxu0
    %v220 = vadd.f32 %v92, %v219
    %v221 = vpop.f32.mrf.mxu0
    %222 = vdwg.mxu0
    %v223 = vxor.u32 %v220, 2147483648
    %v224 = vmul.f32 %v223, 1.442695
    %v225 = vpow.pop %v224
    %v226 = vadd.f32 %v225, 1.0
    %v227 = vrcp.pop %v226
    %v228 = vmul.f32 1.0, %v227
    %v229 = vmul.f32 %v220, %v228
    %v230 = vld [vmem:[%s3] sm:$0xf]
    %v231 = vld [vmem:[%s4] sm:$0x1]
    %v233 = vlaneseq
    %v234 = vshrl.u32 %v233, 7
    %v235 = vsub.s32 0, %v234
    %v236 = vrot.slane %v231, %v235
    %vm238 = vcmask 31744
    %v240 = vsel %vm238, %v229, 0
    %vm242 = vcmask 1043456
    %v244 = vsel %vm242, %v230, 0
    %246 = vmatprep.subr.mxu0 0.0
    %247 = vmatpush1.msra.mxu0 0.0
    %248 = vmatprep.subr.mxu0 0.0
    %249 = vmatpush1.msra.mxu0 0.0
    %250 = vmatprep.subr.mxu0 0.0
    %251 = vmatpush1.msra.mxu0 0.0
    %252 = vmatprep.subr.mxu0 0.0
    %253 = vmatpush1.msra.mxu0 0.0
    %254 = vmatprep.subr.mxu0 0.0
    %255 = vmatpush1.msra.mxu0 0.0
    %256 = vmatprep.subr.mxu0 0.0
    %257 = vmatpush1.msra.mxu0 0.0
    %258 = vmatprep.subr.mxu0 0.0
    %259 = vmatpush1.msra.mxu0 0.0
    %260 = vmatprep.subr.mxu0 0.0
    %261 = vmatpush1.msra.mxu0 0.0
    %262 = vmatprep.subr.mxu0 0.0
    %263 = vmatpush1.msra.mxu0 0.0
    %264 = vmatprep.subr.mxu0 0.0
    %265 = vmatpush1.msra.mxu0 0.0
    %266 = vmatprep.subr.mxu0 0.0
    %267 = vmatpush1.msra.mxu0 0.0
    %268 = vmatprep.subr.mxu0 0.0
    %269 = vmatpush1.msra.mxu0 0.0
    %270 = vmatprep.subr.mxu0 0.0
    %271 = vmatpush1.msra.mxu0 0.0
    %272 = vmatprep.subr.mxu0 0.0
    %273 = vmatpush1.msra.mxu0 0.0
    %274 = vmatprep.subr.mxu0 0.0
    %275 = vmatpush1.msra.mxu0 0.0
    %276 = vmatprep.subr.mxu0 0.0
    %277 = vmatpush1.msra.mxu0 %v244
    %278 = vmatprep.subr.mxu0 0.0
    %279 = vmatpush2.msra.mxu0 0.0
    %280 = vmatprep.subr.mxu0 0.0
    %281 = vmatpush2.msra.mxu0 0.0
    %282 = vmatprep.subr.mxu0 0.0
    %283 = vmatpush2.msra.mxu0 0.0
    %284 = vmatprep.subr.mxu0 0.0
    %285 = vmatpush2.msra.mxu0 0.0
    %286 = vmatprep.subr.mxu0 0.0
    %287 = vmatpush2.msra.mxu0 0.0
    %288 = vmatprep.subr.mxu0 0.0
    %289 = vmatpush2.msra.mxu0 0.0
    %290 = vmatprep.subr.mxu0 0.0
    %291 = vmatpush2.msra.mxu0 0.0
    %292 = vmatprep.subr.mxu0 0.0
    %293 = vmatpush2.msra.mxu0 0.0
    %294 = vmatprep.subr.mxu0 0.0
    %295 = vmatpush2.msra.mxu0 0.0
    %296 = vmatprep.subr.mxu0 0.0
    %297 = vmatpush2.msra.mxu0 0.0
    %298 = vmatprep.subr.mxu0 0.0
    %299 = vmatpush2.msra.mxu0 0.0
    %300 = vmatprep.subr.mxu0 0.0
    %301 = vmatpush2.msra.mxu0 0.0
    %302 = vmatprep.subr.mxu0 0.0
    %303 = vmatpush2.msra.mxu0 0.0
    %304 = vmatprep.subr.mxu0 0.0
    %305 = vmatpush2.msra.mxu0 0.0
    %306 = vmatprep.subr.mxu0 0.0
    %307 = vmatpush2.msra.mxu0 0.0
    %308 = vmatprep.subr.mxu0 0.0
    %309 = vmatpush2.msra.mxu0 0.0
    %310 = vmatprep.mubr.f32.mxu0 0.0
    %311 = vmatmul.mubr.f32.gmra.mxu0 %v240
    %v312 = vpop.f32.mrf.mxu0
    %v313 = vadd.f32 %v236, %v312
    %v314 = vpop.f32.mrf.mxu0
    %315 = vdwg.mxu0
    %v316 = vxor.u32 %v313, 2147483648
    %v317 = vmul.f32 %v316, 1.442695
    %v318 = vpow.pop %v317
    %v319 = vadd.f32 %v318, 1.0
    %v320 = vrcp.pop %v319
    %v321 = vmul.f32 1.0, %v320
    %v322 = vlaneseq
    %v323 = vshrl.u32 %v322, 7
    %v324 = vsub.s32 0, %v323
    %v325 = vrot.slane %v321, %v324
    %327 = vbcast.lane.b32.xlu0 %v325, 256
    %v328 = vpop.permute.xlu0 %327
    %s330 = sor.u32 256, 8
    %331 = vbcast.lane.b32.xlu0 %v325, %s330
    %v332 = vpop.permute.xlu0 %331
    %s334 = sor.u32 256, 16
    %335 = vbcast.lane.b32.xlu0 %v325, %s334
    %v336 = vpop.permute.xlu0 %335
    %s338 = sor.u32 256, 24
    %339 = vbcast.lane.b32.xlu0 %v325, %s338
    %v340 = vpop.permute.xlu0 %339
    %v341 = vlaneseq
    %v342 = vshrl.u32 %v341, 7
    %v343 = vsub.s32 1, %v342
    %v344 = vrot.slane %v321, %v343
    %346 = vbcast.lane.b32.xlu0 %v344, 256
    %v347 = vpop.permute.xlu0 %346
    %s349 = sor.u32 256, 8
    %350 = vbcast.lane.b32.xlu0 %v344, %s349
    %v351 = vpop.permute.xlu0 %350
    %s353 = sor.u32 256, 16
    %354 = vbcast.lane.b32.xlu0 %v344, %s353
    %v355 = vpop.permute.xlu0 %354
    %s357 = sor.u32 256, 24
    %358 = vbcast.lane.b32.xlu0 %v344, %s357
    %v359 = vpop.permute.xlu0 %358
    %v360 = vmul.f32 %v35, %v328
    %v361 = vmul.f32 %v36, %v328
    %v362 = vmul.f32 %v37, %v332
    %v363 = vmul.f32 %v38, %v332
    %v364 = vmul.f32 %v39, %v336
    %v365 = vmul.f32 %v40, %v336
    %v366 = vmul.f32 %v41, %v340
    %v367 = vmul.f32 %v42, %v340
    %v368 = vmul.f32 %v43, %v347
    %v369 = vmul.f32 %v44, %v347
    %v370 = vmul.f32 %v45, %v351
    %v371 = vmul.f32 %v46, %v351
    %v372 = vmul.f32 %v47, %v355
    %v373 = vmul.f32 %v48, %v355
    %v374 = vmul.f32 %v49, %v359
    %v375 = vmul.f32 %v50, %v359
    %376 = vst [vmem:[#allocation5] sm:$0xff] %v360
    %377 = vst [vmem:[#allocation5 + $0x8] sm:$0xff] %v361
    %378 = vst [vmem:[#allocation5 + $0x10] sm:$0xff] %v362
    %379 = vst [vmem:[#allocation5 + $0x18] sm:$0xff] %v363
    %380 = vst [vmem:[#allocation5 + $0x20] sm:$0xff] %v364
    %381 = vst [vmem:[#allocation5 + $0x28] sm:$0xff] %v365
    %382 = vst [vmem:[#allocation5 + $0x30] sm:$0xff] %v366
    %383 = vst [vmem:[#allocation5 + $0x38] sm:$0xff] %v367
    %384 = vst [vmem:[#allocation5 + $0x40] sm:$0xff] %v368
    %385 = vst [vmem:[#allocation5 + $0x48] sm:$0xff] %v369
    %386 = vst [vmem:[#allocation5 + $0x50] sm:$0xff] %v370
    %387 = vst [vmem:[#allocation5 + $0x58] sm:$0xff] %v371
    %388 = vst [vmem:[#allocation5 + $0x60] sm:$0xff] %v372
    %389 = vst [vmem:[#allocation5 + $0x68] sm:$0xff] %v373
    %390 = vst [vmem:[#allocation5 + $0x70] sm:$0xff] %v374
    %391 = vst [vmem:[#allocation5 + $0x78] sm:$0xff] %v375
    // Predicated region
    $region26: #{tpu_custom_call.1} parent=1 // pred_check
      _
    $region27: #{tpu_custom_call.1} parent=1 // pred_check_branch
      %393 = sbr.rel (0) target = $region29
    $region28: #{tpu_custom_call.1} parent=1 // pred_region
      %s395 = ssub.s32 2048, 2048
      %396 = vsyncadd [#allocation4], %s395
      %s397 = sshll.u32 [#allocation5], 4
      %s398 = int_to_ptr.vmem [resolvable:$true] %s397
      %403 = dma.vmem_to_hbm [thread:$0]  %s398, 2048, %s5, [#allocation4], 256, 256, 16
    $region29: #{tpu_custom_call.1} parent=1 // pred_fallthru
      _
    // Predicated region
    $region30: #{tpu_custom_call.1} parent=1 // pred_check
      _
    $region31: #{tpu_custom_call.1} parent=1 // pred_check_branch
      %405 = sbr.rel (0) target = $region33
    $region32: #{tpu_custom_call.1} parent=1 // pred_region
      %406 = dma.done [#allocation4], 2048
    $region33: #{tpu_custom_call.1} parent=1 // pred_fallthru
      _
    %407 = vsyncpa [#allocation3], 1
    %408 = vsyncpa [#allocation4], 1

</llo_original>
